<compile_context>
chip_gen: v5e
topology: v5e:2x2
jax: 0.10.0
libtpu: 0.0.40
codegen_flags: <defaults>
</compile_context>

<pallas_src>
import functools

import jax
import jax.numpy as jnp
from jax.experimental import pallas as pl
from jax.experimental.pallas import tpu as pltpu


def _round_up(a: int, m: int) -> int:
    return (a + m - 1) // m * m


def patch_embed_kernel(x_ref, w_ref, b_ref, o_ref):
    # x_ref: (TM, Kp)   — a tile of flattened patches (streamed)
    # w_ref: (Kp, N)    — flattened conv weight (resident: N = Dp; tiled: N = tn)
    # b_ref: (1,  N)    — bias (f32)
    # o_ref: (TM, N)
    acc = jnp.dot(x_ref[...], w_ref[...], preferred_element_type=jnp.float32)
    o_ref[...] = (acc + b_ref[...]).astype(o_ref.dtype)


@functools.partial(jax.jit, static_argnames=("patch_size", "tm", "tn", "use_bf16"))
def patch_embed(x, weight, bias, patch_size, *, tm=None, tn=None, use_bf16=True):
    """x: (B, C, H, W) NCHW; weight: (D, C, p, p); bias: (D,) -> (B, n_patches, D)."""
    B, C, H, W = x.shape
    D = weight.shape[0]
    p = patch_size
    hp, wp = H // p, W // p
    n_patches = hp * wp
    K = C * p * p
    M = B * n_patches
    out_dtype = x.dtype

    # Match Conv2d(stride=p, VALID): silently drop any spatial remainder.
    x = x[:, :, : hp * p, : wp * p]

    in_dtype = jnp.bfloat16 if use_bf16 else x.dtype

    # --- layout glue: (B,C,H,W) -> (B*n_patches, C*p*p), row-major patches ---
    # (the bf16 cast fuses into this transpose pass)
    xp = x.reshape(B, C, hp, p, wp, p)
    xp = jnp.transpose(xp, (0, 2, 4, 1, 3, 5)).reshape(M, K).astype(in_dtype)

    # Conv weight (D, C, p, p) -> (K, D) so that patches @ Wk == conv output.
    wk = weight.reshape(D, K).T.astype(in_dtype)

    # --- tiling / alignment (zero padding is exact; sliced off afterwards) ---
    Kp = _round_up(K, 128)
    Dp = _round_up(D, 128)
    if tn is None:
        tn = next(c for c in (512, 256, 128) if Dp % c == 0)
    if tm is None:
        # Big tiles to amortize per-step overhead, but >= 2 M tiles when M >= 16
        # so both v7x TensorCores get work even at B=1.
        tm = min(512, _round_up(max(M // 2, 8), 8))
    Mp = _round_up(M, tm)

    xp = jnp.pad(xp, ((0, Mp - M), (0, Kp - K)))
    wk = jnp.pad(wk, ((0, Kp - K), (0, Dp - D)))
    bk = jnp.pad(bias.astype(jnp.float32), (0, Dp - D)).reshape(1, Dp)

    in_item = jnp.dtype(in_dtype).itemsize
    out_item = jnp.dtype(out_dtype).itemsize

    # Residency decision: full (Kp, Dp) weight + full-width output tile.
    resident_bytes = (2 * tm * Kp * in_item      # x, double-buffered
                      + 2 * Kp * Dp * in_item    # weight (fetched once)
                      + 2 * Dp * 4               # bias
                      + 2 * tm * Dp * out_item)  # output, double-buffered
    w_resident = resident_bytes <= (24 << 20)    # true for all real ViT dims

    if w_resident:
        # 1-D grid over M tiles; weight/bias DMA'd exactly once, x/out once each.
        grid = (Mp // tm,)
        in_specs = [
            pl.BlockSpec((tm, Kp), lambda i: (i, 0)),
            pl.BlockSpec((Kp, Dp), lambda i: (0, 0)),   # resident weight
            pl.BlockSpec((1, Dp), lambda i: (0, 0)),    # resident bias
        ]
        out_specs = pl.BlockSpec((tm, Dp), lambda i: (i, 0))
        semantics = ("parallel",)
        buf_bytes = resident_bytes
    else:
        # Huge-weight fallback: tile N and put it OUTERMOST so each weight tile
        # is DMA'd only once (Pallas skips DMAs for repeated block indices).
        grid = (Dp // tn, Mp // tm)
        in_specs = [
            pl.BlockSpec((tm, Kp), lambda j, i: (i, 0)),
            pl.BlockSpec((Kp, tn), lambda j, i: (0, j)),
            pl.BlockSpec((1, tn), lambda j, i: (0, j)),
        ]
        out_specs = pl.BlockSpec((tm, tn), lambda j, i: (i, j))
        semantics = ("parallel", "parallel")
        buf_bytes = (2 * tm * Kp * in_item + 2 * Kp * tn * in_item
                     + 2 * tn * 4 + 2 * tm * tn * out_item)

    # Derived VMEM limit with headroom, capped conservatively for v7x (64 MiB).
    vmem_limit = int(min(max(buf_bytes + (8 << 20), 16 << 20), 40 << 20))

    cost = pl.CostEstimate(
        flops=2 * Mp * Kp * Dp,
        transcendentals=0,
        bytes_accessed=(Mp * Kp * in_item + Kp * Dp * in_item + Dp * 4
                        + Mp * Dp * out_item),
    )

    out = pl.pallas_call(
        patch_embed_kernel,
        out_shape=jax.ShapeDtypeStruct((Mp, Dp), out_dtype),
        grid_spec=pltpu.PrefetchScalarGridSpec(
            num_scalar_prefetch=0,
            grid=grid,
            in_specs=in_specs,
            out_specs=out_specs,
        ),
        compiler_params=pltpu.CompilerParams(
            dimension_semantics=semantics,
            vmem_limit_bytes=vmem_limit,
        ),
        cost_estimate=cost,
    )(xp, wk, bk)

    # Slice off alignment padding; (M, D) -> (B, n_patches, D) is a free reshape.
    return out[:M, :D].reshape(B, n_patches, D)


def reference_patch_embed(x, weight, bias, patch_size):
    """Pure-JAX reference using a real strided conv (== PyTorch Conv2d)."""
    y = jax.lax.conv_general_dilated(
        x, weight,
        window_strides=(patch_size, patch_size),
        padding="VALID",
        dimension_numbers=("NCHW", "OIHW", "NCHW"),
    ) + bias.reshape(1, -1, 1, 1)
    B, D, Hp, Wp = y.shape
    return jnp.transpose(y.reshape(B, D, Hp * Wp), (0, 2, 1))


if __name__ == "__main__":
    # Small shapes consistent with the module: img=16, patch=4, C=4, D=32, B=2
    B, C, H, W = 2, 4, 16, 16
    patch_size = 4
    embed_dim = 32

    key = jax.random.PRNGKey(0)
    kx, kw, kb = jax.random.split(key, 3)

    x = jax.random.normal(kx, (B, C, H, W), dtype=jnp.float32)
    fan_in = C * patch_size * patch_size
    weight = jax.random.uniform(
        kw, (embed_dim, C, patch_size, patch_size), dtype=jnp.float32,
        minval=-1.0 / jnp.sqrt(fan_in), maxval=1.0 / jnp.sqrt(fan_in))
    bias = jax.random.uniform(
        kb, (embed_dim,), dtype=jnp.float32,
        minval=-1.0 / jnp.sqrt(fan_in), maxval=1.0 / jnp.sqrt(fan_in))

    n_patches = (H // patch_size) * (W // patch_size)

    # Default (bf16 inputs, f32 accumulation) vs. reference on bf16-cast data.
    out_bf16 = jax.block_until_ready(patch_embed(x, weight, bias, patch_size))
    x_b = x.astype(jnp.bfloat16).astype(jnp.float32)
    w_b = weight.astype(jnp.bfloat16).astype(jnp.float32)
    ref_b = reference_patch_embed(x_b, w_b, bias, patch_size)
    assert out_bf16.shape == (B, n_patches, embed_dim)
    assert jnp.allclose(out_bf16, ref_b, atol=1e-2, rtol=1e-2)

    # f32 verification path vs. exact f32 reference.
    out_f32 = jax.block_until_ready(
        patch_embed(x, weight, bias, patch_size, use_bf16=False))
    ref = reference_patch_embed(x, weight, bias, patch_size)
    assert out_f32.shape == (B, n_patches, embed_dim)
    assert jnp.allclose(out_f32, ref, atol=1e-5, rtol=1e-5)

    print("KERNEL_OK")
</pallas_src>

<mosaic_0001>
module attributes {stable_mosaic.version = 11 : i64} {
  func.func @patch_embed_kernel(%arg0: i32, %arg1: memref<16x128xbf16, #tpu.memory_space<vmem>>, %arg2: memref<128x128xbf16, #tpu.memory_space<vmem>>, %arg3: memref<1x128xf32, #tpu.memory_space<vmem>>, %arg4: memref<16x128xf32, #tpu.memory_space<vmem>>) attributes {dimension_semantics = [#tpu.dimension_semantics<parallel>], iteration_bounds = array<i64: 2>, scalar_prefetch = 0 : i64, scratch_operands = 0 : i64, tpu.core_type = #tpu.core_type<tc>, window_params = [{transform_indices = @transform_0, window_bounds = array<i64: 16, 128>}, {pipeline_mode = #tpu.pipeline_mode<synchronous>, transform_indices = @transform_1, window_bounds = array<i64: 128, 128>}, {pipeline_mode = #tpu.pipeline_mode<synchronous>, transform_indices = @transform_2, window_bounds = array<i64: 1, 128>}, {transform_indices = @transform_3, window_bounds = array<i64: 16, 128>}]} {
    %c0 = arith.constant 0 : index
    %c0_0 = arith.constant 0 : index
    %0 = vector.load %arg1[%c0, %c0_0] : memref<16x128xbf16, #tpu.memory_space<vmem>>, vector<16x128xbf16>
    %c0_1 = arith.constant 0 : index
    %c0_2 = arith.constant 0 : index
    %1 = vector.load %arg2[%c0_1, %c0_2] : memref<128x128xbf16, #tpu.memory_space<vmem>>, vector<128x128xbf16>
    %cst = arith.constant dense<0.000000e+00> : vector<16x128xf32>
    %2 = tpu.matmul %0, %1, %cst {dimension_numbers = #tpu.dot_dimension_numbers<[1], [0], [0], [1], [0, 0, 1, 1], [], []>} : vector<16x128xbf16>, vector<128x128xbf16>, vector<16x128xf32> -> vector<16x128xf32>
    %c0_3 = arith.constant 0 : index
    %c0_4 = arith.constant 0 : index
    %3 = vector.load %arg3[%c0_3, %c0_4] : memref<1x128xf32, #tpu.memory_space<vmem>>, vector<1x128xf32>
    %4 = vector.broadcast %3 : vector<1x128xf32> to vector<16x128xf32>
    %5 = arith.addf %2, %4 : vector<16x128xf32>
    %c0_5 = arith.constant 0 : index
    %c0_6 = arith.constant 0 : index
    %6 = vector.load %arg4[%c0_5, %c0_6] : memref<16x128xf32, #tpu.memory_space<vmem>>, vector<16x128xf32>
    tpu.vector_store %arg4[%c0_5, %c0_6], %5 {strides = array<i32>} : memref<16x128xf32, #tpu.memory_space<vmem>>, vector<16x128xf32>,
    return
  }
  func.func @transform_0(%arg0: i32) -> (i32, i32) {
    %c0_i32 = arith.constant 0 : i32
    %c0_i32_0 = arith.constant 0 : i32
    return %arg0, %c0_i32 : i32, i32
  }
  func.func @transform_1(%arg0: i32) -> (i32, i32) {
    %c0_i32 = arith.constant 0 : i32
    %c0_i32_0 = arith.constant 0 : i32
    %c0_i32_1 = arith.constant 0 : i32
    return %c0_i32, %c0_i32_0 : i32, i32
  }
  func.func @transform_2(%arg0: i32) -> (i32, i32) {
    %c0_i32 = arith.constant 0 : i32
    %c0_i32_0 = arith.constant 0 : i32
    %c0_i32_1 = arith.constant 0 : i32
    return %c0_i32, %c0_i32_0 : i32, i32
  }
  func.func @transform_3(%arg0: i32) -> (i32, i32) {
    %c0_i32 = arith.constant 0 : i32
    %c0_i32_0 = arith.constant 0 : i32
    return %arg0, %c0_i32 : i32, i32
  }
}

</mosaic_0001>

<llo_original>
// kernel: patch_embed.1
$region0: #{patch_embed.1}
  #allocation0 [shape = 'u32[]', space=smem, size = 0x4, offset = 0x4, fixed_abs, tag = 'smem constant byte address 0x4 - core index']
  #allocation1 [shape = 'u32[72,128]{1,0:T(1,128)}', space=vmem, size = 0x9000, scoped, tag = 'internal scratch']
  %s0 = inlined_call_operand.vmem [shape: bf16[32,128], index: 0, kind: input, shape index: {}]
  %s1 = inlined_call_operand.vmem [shape: bf16[128,128], index: 1, kind: input, shape index: {}]
  %s2 = inlined_call_operand.vmem [shape: f32[1,128], index: 2, kind: input, shape index: {}]
  %s3 = inlined_call_operand.hbm [shape: f32[32,128], index: 3, kind: output, shape index: {}]
  %s4 = sld [smem:[#allocation0]]
  $region45: #{patch_embed.1} parent=0
    _
  %s6 = ssub.s32 1, %s4
  %s7 = scalar_select 0, %s6, %s4
  $region1: #{patch_embed.1} parent=0
    #allocation2 [shape = 'u8[16384]{0}', space=vmem, size = 0x4000, scoped, tag = 'output window, operand 0']
    #allocation3 [shape = 's32[2]{0}', space=sflag, size = 0x8, scoped, tag = 'scoped memory for patch_embed.1']
    %8 = vsyncpa [#allocation3], 0
    %s9 = scalar_lea.sflag [#allocation3], 1
    %10 = vsyncpa %s9, 0
    loop: start=0, step=1, limit=4
    $region2: #{patch_embed.1} parent=1 // loop_pre_header
      _
    $region3: #{patch_embed.1} parent=1 // loop_header
      %s12 = sphi 0, %s16
      %p13 = scmp.ge.s32.totalorder %s12, 4
      %s22 = sphi 0, %s24
      %s25 = sphi 0, %s22
      %s26 = sphi 0, %s25
      %s42 = sphi 0, %s26
      %s46 = sphi 0, %s46
      %s48 = sphi 0, %s46
      %s49 = sphi 0, %s48
      %s63 = sphi 0, %s49
      %s67 = sphi 0, %s67
      %s69 = sphi 0, %s67
      %s70 = sphi 0, %s69
      %s84 = sphi 0, %s70
      %s90 = sphi 0, %s92
      %s93 = sphi 0, %s90
      %s94 = sphi 0, %s93
      %s110 = sphi 0, %s94
    $region4: #{patch_embed.1} parent=1 // loop_header_branch
      %15 = sbr.rel (%p13) target = $region8
    $region5: #{patch_embed.1} parent=1 // loop_body
      %s17 = ssub.s32 %s12, 1
      %s18 = ssub.s32 %s12, 2
      %s19 = sadd.s32 %s12, 1
      %s20 = ssub.s32 %s12, %s19
      %p21 = scmp.eq.s32.totalorder %s20, 0
      %s23 = sadd.s32 %s22, 1
      %s24 = scalar_select %p21, %s22, %s23
      %p27 = pneg %p21
      %p28 = scmp.eq.s32.totalorder %s12, 1
      %p29 = por %p27, %p28
      %p30 = scmp.ne.s32.totalorder %s22, %s25
      %p31 = scmp.eq.s32.totalorder %s12, 0
      %p32 = por %p30, %p31
      %p33 = scmp.ne.s32.totalorder %s22, %s25
      %p34 = scmp.eq.s32.totalorder %s17, 1
      %p35 = por %p33, %p34
      %p36 = scmp.ne.s32.totalorder %s25, %s26
      %p37 = scmp.eq.s32.totalorder %s17, 0
      %p38 = por %p36, %p37
      %p39 = scmp.ne.s32.totalorder %s25, %s26
      %p40 = scmp.eq.s32.totalorder %s18, 1
      %p41 = por %p39, %p40
      %p43 = scmp.ne.s32.totalorder %s26, %s42
      %p44 = scmp.eq.s32.totalorder %s18, 0
      %p45 = por %p43, %p44
      %s47 = sadd.s32 %s46, 1
      %p50 = scmp.eq.s32.totalorder %s12, 1
      %p51 = scmp.ne.s32.totalorder %s46, %s48
      %p52 = scmp.eq.s32.totalorder %s12, 0
      %p53 = por %p51, %p52
      %p54 = scmp.ne.s32.totalorder %s46, %s48
      %p55 = scmp.eq.s32.totalorder %s17, 1
      %p56 = por %p54, %p55
      %p57 = scmp.ne.s32.totalorder %s48, %s49
      %p58 = scmp.eq.s32.totalorder %s17, 0
      %p59 = por %p57, %p58
      %p60 = scmp.ne.s32.totalorder %s48, %s49
      %p61 = scmp.eq.s32.totalorder %s18, 1
      %p62 = por %p60, %p61
      %p64 = scmp.ne.s32.totalorder %s49, %s63
      %p65 = scmp.eq.s32.totalorder %s18, 0
      %p66 = por %p64, %p65
      %s68 = sadd.s32 %s67, 1
      %p71 = scmp.eq.s32.totalorder %s12, 1
      %p72 = scmp.ne.s32.totalorder %s67, %s69
      %p73 = scmp.eq.s32.totalorder %s12, 0
      %p74 = por %p72, %p73
      %p75 = scmp.ne.s32.totalorder %s67, %s69
      %p76 = scmp.eq.s32.totalorder %s17, 1
      %p77 = por %p75, %p76
      %p78 = scmp.ne.s32.totalorder %s69, %s70
      %p79 = scmp.eq.s32.totalorder %s17, 0
      %p80 = por %p78, %p79
      %p81 = scmp.ne.s32.totalorder %s69, %s70
      %p82 = scmp.eq.s32.totalorder %s18, 1
      %p83 = por %p81, %p82
      %p85 = scmp.ne.s32.totalorder %s70, %s84
      %p86 = scmp.eq.s32.totalorder %s18, 0
      %p87 = por %p85, %p86
      %s88 = ssub.s32 %s12, %s19
      %p89 = scmp.eq.s32.totalorder %s88, 0
      %s91 = sadd.s32 %s90, 1
      %s92 = scalar_select %p89, %s90, %s91
      %p95 = pneg %p89
      %p96 = scmp.eq.s32.totalorder %s12, 1
      %p97 = por %p95, %p96
      %p98 = scmp.ne.s32.totalorder %s90, %s93
      %p99 = scmp.eq.s32.totalorder %s12, 0
      %p100 = por %p98, %p99
      %p101 = scmp.ne.s32.totalorder %s90, %s93
      %p102 = scmp.eq.s32.totalorder %s17, 1
      %p103 = por %p101, %p102
      %p104 = scmp.ne.s32.totalorder %s93, %s94
      %p105 = scmp.eq.s32.totalorder %s17, 0
      %p106 = por %p104, %p105
      %p107 = scmp.ne.s32.totalorder %s93, %s94
      %p108 = scmp.eq.s32.totalorder %s18, 1
      %p109 = por %p107, %p108
      %p111 = scmp.ne.s32.totalorder %s94, %s110
      %p112 = scmp.eq.s32.totalorder %s18, 0
      %p113 = por %p111, %p112
      %p114 = scmp.le.s32.totalorder 1, %s12
      %p115 = scmp.lt.s32.totalorder %s12, 3
      %p116 = pnand %p114, %p115
      %p117 = pneg %p116
      // Predicated region
      $region9: #{patch_embed.1} parent=5 // pred_check
        _
      $region10: #{patch_embed.1} parent=5 // pred_check_branch
        %119 = sbr.rel (%p116) target = $region12
      $region11: #{patch_embed.1} parent=5 // pred_region
        %s120 = ssub.s32 %s12, 1
        // Predicated region
        $region13: #{patch_embed.1} parent=11 // pred_check
          %p121 = pneg %p59
        $region14: #{patch_embed.1} parent=11 // pred_check_branch
          %123 = sbr.rel (%p121) target = $region16
        $region15: #{patch_embed.1} parent=11 // pred_region
          _
        $region16: #{patch_embed.1} parent=11 // pred_fallthru
          _
        // Predicated region
        $region17: #{patch_embed.1} parent=11 // pred_check
          %p124 = pneg %p80
        $region18: #{patch_embed.1} parent=11 // pred_check_branch
          %126 = sbr.rel (%p124) target = $region20
        $region19: #{patch_embed.1} parent=11 // pred_region
          _
        $region20: #{patch_embed.1} parent=11 // pred_fallthru
          _
      $region12: #{patch_embed.1} parent=5 // pred_fallthru
        _
      %p127 = scmp.lt.s32.totalorder %s12, 2
      // Predicated region
      $region21: #{patch_embed.1} parent=5 // pred_check
        %p128 = pneg %p127
      $region22: #{patch_embed.1} parent=5 // pred_check_branch
        %130 = sbr.rel (%p128) target = $region24
      $region23: #{patch_embed.1} parent=5 // pred_region
        // Predicated region
        $region25: #{patch_embed.1} parent=23 // pred_check
          %p131 = pneg %p32
        $region26: #{patch_embed.1} parent=23 // pred_check_branch
          %133 = sbr.rel (%p131) target = $region28
        $region27: #{patch_embed.1} parent=23 // pred_region
          %s134 = smul.u32 2, %s12
          %p135 = scmp.lt.s32.totalorder %s134, 3
          %s136 = scalar_select %p135, %s134, 3
          %s137 = smul.addr %s136, 4
          %s138 = scalar_lea.vmem %s0, %s137
          %s139 = smul.u32 2, %s12
        $region28: #{patch_embed.1} parent=23 // pred_fallthru
          _
      $region24: #{patch_embed.1} parent=5 // pred_fallthru
        _
      %p140 = scmp.le.s32.totalorder 1, %s12
      %p141 = scmp.lt.s32.totalorder %s12, 3
      %p142 = pnand %p140, %p141
      %p143 = pneg %p142
      // Predicated region
      $region29: #{patch_embed.1} parent=5 // pred_check
        _
      $region30: #{patch_embed.1} parent=5 // pred_check_branch
        %145 = sbr.rel (%p142) target = $region32
      $region31: #{patch_embed.1} parent=5 // pred_region
        %s146 = ssub.s32 %s12, 1
        %s147 = smul.u32 2, %s17
        %p148 = scmp.lt.s32.totalorder %s147, 3
        %s149 = scalar_select %p148, %s147, 3
        %s150 = smul.addr %s149, 4
        %s151 = scalar_lea.vmem %s0, %s150
        %p152 = pneg %p38
        %p153 = pneg %p35
        %p154 = pneg %p59
        %p155 = pneg %p56
        %p156 = pneg %p80
        %p157 = pneg %p77
        %p158 = pneg %p106
        %p159 = pneg %p103
        %s160 = sand.u32 %s93, 1
        %s161 = scalar_lea.sflag [#allocation3], %s160
        %s162 = sand.u32 %s93, 1
        %s163 = smul.addr %s162, 16
        %s164 = scalar_lea.vmem [#allocation2], %s163
        %s165 = smul.u32 2, %s17
        %p166 = scmp.lt.s32.totalorder %s165, 3
        %s167 = scalar_select %p166, %s165, 3
        %s168 = smul.addr %s167, 4
        %s169 = scalar_lea.vmem %s0, %s168
        %s170 = smul.u32 2, %s17
        %s171 = smul.u32 2, %s17
        %v172 = vld [vmem:[%s169] sm:$0xf]
        %v173 = vld [vmem:[%s169 + $0x4] sm:$0xf]
        %v174 = vld [vmem:[%s1] sm:$0xf]
        %v175 = vld [vmem:[%s1 + $0x4] sm:$0xf]
        %v176 = vld [vmem:[%s1 + $0x8] sm:$0xf]
        %v177 = vld [vmem:[%s1 + $0xc] sm:$0xf]
        %v178 = vld [vmem:[%s1 + $0x10] sm:$0xf]
        %v179 = vld [vmem:[%s1 + $0x14] sm:$0xf]
        %v180 = vld [vmem:[%s1 + $0x18] sm:$0xf]
        %v181 = vld [vmem:[%s1 + $0x1c] sm:$0xf]
        %v182 = vld [vmem:[%s1 + $0x20] sm:$0xf]
        %v183 = vld [vmem:[%s1 + $0x24] sm:$0xf]
        %v184 = vld [vmem:[%s1 + $0x28] sm:$0xf]
        %v185 = vld [vmem:[%s1 + $0x2c] sm:$0xf]
        %v186 = vld [vmem:[%s1 + $0x30] sm:$0xf]
        %v187 = vld [vmem:[%s1 + $0x34] sm:$0xf]
        %v188 = vld [vmem:[%s1 + $0x38] sm:$0xf]
        %v189 = vld [vmem:[%s1 + $0x3c] sm:$0xf]
        %v190 = vld [vmem:[%s2] sm:$0x1]
        %v192 = vperm.slane %v190, 0
        %v196 = vunpack.c.l.b16 %v172
        %v197 = vunpack.c.l.b16 %v173
        %v198 = vpack.c.b16 %v197, %v196
        %v216 = vunpack.c.l.b16 %v174
        %v217 = vunpack.c.l.b16 %v175
        %v218 = vunpack.c.l.b16 %v176
        %v219 = vunpack.c.l.b16 %v177
        %v220 = vunpack.c.l.b16 %v178
        %v221 = vunpack.c.l.b16 %v179
        %v222 = vunpack.c.l.b16 %v180
        %v223 = vunpack.c.l.b16 %v181
        %v224 = vunpack.c.l.b16 %v182
        %v225 = vunpack.c.l.b16 %v183
        %v226 = vunpack.c.l.b16 %v184
        %v227 = vunpack.c.l.b16 %v185
        %v228 = vunpack.c.l.b16 %v186
        %v229 = vunpack.c.l.b16 %v187
        %v230 = vunpack.c.l.b16 %v188
        %v231 = vunpack.c.l.b16 %v189
        %v232 = vpack.c.b16 %v217, %v216
        %v233 = vpack.c.b16 %v219, %v218
        %v234 = vpack.c.b16 %v221, %v220
        %v235 = vpack.c.b16 %v223, %v222
        %v236 = vpack.c.b16 %v225, %v224
        %v237 = vpack.c.b16 %v227, %v226
        %v238 = vpack.c.b16 %v229, %v228
        %v239 = vpack.c.b16 %v231, %v230
        %248 = vmatpush.bf16.msra.mxu0 %v239
        %249 = vmatpush.bf16.msra.mxu0 %v238
        %250 = vmatpush.bf16.msra.mxu0 %v237
        %251 = vmatpush.bf16.msra.mxu0 %v236
        %252 = vmatpush.bf16.msra.mxu0 %v235
        %253 = vmatpush.bf16.msra.mxu0 %v234
        %254 = vmatpush.bf16.msra.mxu0 %v233
        %255 = vmatpush.bf16.msra.mxu0 %v232
        %256 = vmatmul.bf16.gmra.mxu0 %v198
        %v257 = vpop.f32.mrf.mxu0
        %v258 = vadd.f32 %v192, %v257
        %v259 = vpop.f32.mrf.mxu0
        %v260 = vadd.f32 %v192, %v259
        %261 = vdwg.mxu0
        %262 = vst [vmem:[%s164] sm:$0xff] %v258
        %263 = vst [vmem:[%s164 + $0x8] sm:$0xff] %v260
        %s264 = sand.u32 %s93, 1
        %s265 = scalar_lea.sflag [#allocation3], %s264
        %s266 = sand.u32 %s93, 1
        %s267 = smul.addr %s266, 16
        %s268 = scalar_lea.vmem [#allocation2], %s267
        // Predicated region
        $region33: #{patch_embed.1} parent=31 // pred_check
          %p269 = pneg %p103
        $region34: #{patch_embed.1} parent=31 // pred_check_branch
          %271 = sbr.rel (%p269) target = $region36
        $region35: #{patch_embed.1} parent=31 // pred_region
          %s272 = smul.u32 2, %s17
          %274 = vsyncadd %s265, 0
          %s275 = smul.addr %s272, 8
          %s276 = scalar_lea.hbm %s3, %s275
          %s277 = sshll.u32 %s268, 4
          %s278 = int_to_ptr.vmem [resolvable:$true] %s277
          %s279 = sshll.u32 %s276, 4
          %s280 = int_to_ptr.hbm [resolvable:$true] %s279
          %285 = dma.vmem_to_hbm [thread:$0]  %s278, 256, %s280, %s265, 128, 128, 8
        $region36: #{patch_embed.1} parent=31 // pred_fallthru
          _
      $region32: #{patch_embed.1} parent=5 // pred_fallthru
        _
      %p286 = scmp.le.s32.totalorder 2, %s12
      // Predicated region
      $region37: #{patch_embed.1} parent=5 // pred_check
        %p287 = pneg %p286
      $region38: #{patch_embed.1} parent=5 // pred_check_branch
        %289 = sbr.rel (%p287) target = $region40
      $region39: #{patch_embed.1} parent=5 // pred_region
        %s290 = ssub.s32 %s12, 2
        // Predicated region
        $region41: #{patch_embed.1} parent=39 // pred_check
          %p291 = pneg %p109
        $region42: #{patch_embed.1} parent=39 // pred_check_branch
          %293 = sbr.rel (%p291) target = $region44
        $region43: #{patch_embed.1} parent=39 // pred_region
          %s294 = sand.u32 %s94, 1
          %s295 = scalar_lea.sflag [#allocation3], %s294
          %s296 = sand.u32 %s94, 1
          %s297 = smul.addr %s296, 16
          %s298 = scalar_lea.vmem [#allocation2], %s297
          %300 = dma.done %s295, 256
        $region44: #{patch_embed.1} parent=39 // pred_fallthru
          _
      $region40: #{patch_embed.1} parent=5 // pred_fallthru
        _
    $region6: #{patch_embed.1} parent=1 // loop_footer
      %s16 = sadd.s32 1, %s12
    $region7: #{patch_embed.1} parent=1 // loop_footer_branch
      %11 = sbr.rel target = $region3
    $region8: #{patch_embed.1} parent=1 // loop_exit
      _
    %301 = vsyncpa [#allocation3], 1
    %s302 = scalar_lea.sflag [#allocation3], 1
    %303 = vsyncpa %s302, 1

</llo_original>
